<compile_context>
chip_gen: v7x
topology: tpu7x:2x2x1
jax: 0.10.0
libtpu: 0.0.40
codegen_flags: <defaults>
</compile_context>

<pallas_src>
import functools

import jax
import jax.numpy as jnp
from jax.experimental import pallas as pl
from jax.experimental.pallas import tpu as pltpu


def _round_up(x, m):
    return ((x + m - 1) // m) * m


def _rmse_rows_kernel(y_ref, g_ref, m_ref, o_ref, sq_acc, pd_acc, *,
                      hw_total, t_rows, t_hw, mask_tail):
    hw = pl.program_id(1)

    @pl.when(hw == 0)
    def _():
        sq_acc[...] = jnp.zeros_like(sq_acc)
        pd_acc[...] = jnp.zeros_like(pd_acc)

    y = y_ref[...].astype(jnp.float32)
    g = g_ref[...].astype(jnp.float32)
    m = m_ref[...].astype(jnp.float32)

    # Fused masking: (y*m - g*m) == (y - g) * m
    d = (y - g) * m

    if mask_tail:
        # Ragged HW edge: zero out lanes past the true spatial extent so the
        # unspecified out-of-bounds data can't contaminate the accumulators.
        lane = jax.lax.broadcasted_iota(jnp.int32, (t_rows, t_hw), 1) + hw * t_hw
        valid = lane < hw_total
        d = jnp.where(valid, d, 0.0)
        m = jnp.where(valid, m, 0.0)

    # Lane-dense accumulation: pure VPU adds over vreg-aligned 128-lane column
    # slices; no per-step XLU reduce, no masked width-1 stores in the hot loop.
    sq = sq_acc[...]
    pd = pd_acc[...]
    for j in range(t_hw // 128):
        sl = slice(j * 128, (j + 1) * 128)
        dj = d[:, sl]
        sq = sq + dj * dj
        pd = pd + m[:, sl]
    sq_acc[...] = sq
    pd_acc[...] = pd

    @pl.when(hw == pl.num_programs(1) - 1)
    def _():
        # Single 128->1 reduce + exact divide + sqrt, once per row block.
        sse = jnp.sum(sq_acc[...], axis=1, keepdims=True)      # (t_rows, 1)
        predot = jnp.sum(pd_acc[...], axis=1, keepdims=True)   # (t_rows, 1)
        o_ref[...] = jnp.sqrt(sse / predot)


def tesloss_rmse(yhat, gtruth, mask, *, max_t_hw=2048, target_tile_bytes=4 << 20):
    """yhat, gtruth, mask: arrays of shape (N, C, H, W). Returns (C,) float32."""
    N, C, H, W = yhat.shape
    HW = H * W
    R = N * C

    # Flatten: one row per (n, c) pair, spatial dims along lanes (free reshape).
    y2 = yhat.reshape(R, HW)
    g2 = gtruth.reshape(R, HW)
    m2 = mask.reshape(R, HW)

    itemsizes = [jnp.dtype(a.dtype).itemsize for a in (y2, g2, m2)]
    # dtype-specific sublane minimum: 4B -> 8, 2B -> 16, 1B -> 32.
    sub = max(max(8, 32 // s) for s in itemsizes)

    t_hw = min(_round_up(HW, 128), max_t_hw)

    # Per-generation VMEM budget (v5e/v6e: 128 MiB physical, v7x: 64 MiB).
    try:
        vmem_cap = int(pltpu.get_tpu_info().vmem_capacity_bytes)
    except Exception:
        vmem_cap = 64 * 1024 * 1024  # conservative (v7x) fallback
    vmem_limit = min(vmem_cap // 2, 96 * 1024 * 1024)

    # Rows per tile: 3 double-buffered input tiles + two (t_rows,128) f32
    # accumulators must fit in ~3/4 of the scoped limit; target ~4 MiB for the
    # largest single input tile to amortize the ~0.35us per-step overhead.
    per_row_bytes = 2 * t_hw * sum(itemsizes) + 2 * 128 * 4 + 8
    rows_vmem = max(sub, ((vmem_limit * 3 // 4) // per_row_bytes) // sub * sub)
    rows_target = max(sub, (target_tile_bytes // (t_hw * max(itemsizes))) // sub * sub)

    t_rows = min(_round_up(R, sub), rows_vmem, rows_target)

    # Guarantee >= 2 blocks on the "parallel" row axis so v7x's two TensorCores
    # both stream; harmless single extra grid step on v5e/v6e.
    if t_rows >= R and R > sub:
        t_rows = _round_up(pl.cdiv(R, 2), sub)

    grid = (pl.cdiv(R, t_rows), pl.cdiv(HW, t_hw))
    mask_tail = (HW % t_hw) != 0

    kernel = functools.partial(
        _rmse_rows_kernel,
        hw_total=HW, t_rows=t_rows, t_hw=t_hw, mask_tail=mask_tail,
    )

    in_spec = pl.BlockSpec((t_rows, t_hw), lambda r, h: (r, h))
    out_spec = pl.BlockSpec((t_rows, 1), lambda r, h: (r, 0))

    cost = pl.CostEstimate(
        flops=4 * R * HW,
        transcendentals=R,
        bytes_accessed=R * HW * sum(itemsizes) + R * 4,
    )

    out = pl.pallas_call(
        kernel,
        out_shape=jax.ShapeDtypeStruct((R, 1), jnp.float32),
        grid_spec=pltpu.PrefetchScalarGridSpec(
            num_scalar_prefetch=0,
            grid=grid,
            in_specs=[in_spec, in_spec, in_spec],
            out_specs=out_spec,
            scratch_shapes=[
                pltpu.VMEM((t_rows, 128), jnp.float32),
                pltpu.VMEM((t_rows, 128), jnp.float32),
            ],
        ),
        compiler_params=pltpu.CompilerParams(
            dimension_semantics=("parallel", "arbitrary"),
            vmem_limit_bytes=int(vmem_limit),
        ),
        cost_estimate=cost,
    )(y2, g2, m2)

    per_nc = out.reshape(N, C)       # sqrt(mse / predot) per (n, c)
    return jnp.mean(per_nc, axis=0)  # mean over batch -> (C,)


def _reference(yhat, gtruth, mask):
    ym = yhat * mask
    gm = gtruth * mask
    predot = jnp.sum(mask, axis=(2, 3))
    ans = jnp.sum((ym - gm) ** 2, axis=(2, 3)) / predot
    ans = jnp.sqrt(ans)
    return jnp.mean(ans, axis=0)


if __name__ == "__main__":
    key = jax.random.PRNGKey(0)

    # Case 1: aligned small shape (N, C, H, W) = (2, 4, 16, 16).
    k1, k2, k3, key = jax.random.split(key, 4)
    N, C, H, W = 2, 4, 16, 16
    yhat = jax.random.normal(k1, (N, C, H, W), dtype=jnp.float32)
    gtruth = jax.random.normal(k2, (N, C, H, W), dtype=jnp.float32)
    mask = (jax.random.uniform(k3, (N, C, H, W)) > 0.3).astype(jnp.float32)

    out = jax.block_until_ready(tesloss_rmse(yhat, gtruth, mask))
    ref = _reference(yhat, gtruth, mask)
    assert out.shape == (C,)
    assert jnp.allclose(out, ref, rtol=1e-5, atol=1e-5), (out, ref)

    # Case 2: ragged shape (exercises the no-pad / in-kernel tail-mask path).
    k1, k2, k3, key = jax.random.split(key, 4)
    N2, C2, H2, W2 = 3, 5, 10, 13
    yhat2 = jax.random.normal(k1, (N2, C2, H2, W2), dtype=jnp.float32)
    gtruth2 = jax.random.normal(k2, (N2, C2, H2, W2), dtype=jnp.float32)
    mask2 = (jax.random.uniform(k3, (N2, C2, H2, W2)) > 0.3).astype(jnp.float32)

    out2 = jax.block_until_ready(tesloss_rmse(yhat2, gtruth2, mask2))
    ref2 = _reference(yhat2, gtruth2, mask2)
    assert out2.shape == (C2,)
    assert jnp.allclose(out2, ref2, rtol=1e-5, atol=1e-5), (out2, ref2)

    print("KERNEL_OK")
</pallas_src>

<mosaic_0001>
module attributes {stable_mosaic.version = 11 : i64} {
  func.func @_rmse_rows_kernel(%arg0: i32, %arg1: i32, %arg2: memref<8x256xf32, #tpu.memory_space<vmem>>, %arg3: memref<8x256xf32, #tpu.memory_space<vmem>>, %arg4: memref<8x256xf32, #tpu.memory_space<vmem>>, %arg5: memref<8x1xf32, #tpu.memory_space<vmem>>, %arg6: memref<8x128xf32, #tpu.memory_space<vmem>>, %arg7: memref<8x128xf32, #tpu.memory_space<vmem>>) attributes {dimension_semantics = [#tpu.dimension_semantics<parallel>, #tpu.dimension_semantics<arbitrary>], iteration_bounds = array<i64: 1, 1>, scalar_prefetch = 0 : i64, scratch_operands = 2 : i64, tpu.core_type = #tpu.core_type<tc>, window_params = [{transform_indices = @transform_0, window_bounds = array<i64: 8, 256>}, {transform_indices = @transform_1, window_bounds = array<i64: 8, 256>}, {transform_indices = @transform_2, window_bounds = array<i64: 8, 256>}, {transform_indices = @transform_3, window_bounds = array<i64: 8, 1>}]} {
    %c0_i32 = arith.constant 0 : i32
    %0 = arith.cmpi eq, %arg1, %c0_i32 : i32
    %1 = arith.extui %0 : i1 to i32
    %c0_i32_0 = arith.constant 0 : i32
    %2 = arith.cmpi ne, %1, %c0_i32_0 : i32
    scf.if %2 {
      %cst = arith.constant 0.000000e+00 : f32
      %25 = vector.broadcast %cst : f32 to vector<8x128xf32>
      %c0_16 = arith.constant 0 : index
      %c0_17 = arith.constant 0 : index
      %26 = vector.load %arg6[%c0_16, %c0_17] : memref<8x128xf32, #tpu.memory_space<vmem>>, vector<8x128xf32>
      tpu.vector_store %arg6[%c0_16, %c0_17], %25 {strides = array<i32>} : memref<8x128xf32, #tpu.memory_space<vmem>>, vector<8x128xf32>,
      %cst_18 = arith.constant 0.000000e+00 : f32
      %27 = vector.broadcast %cst_18 : f32 to vector<8x128xf32>
      %c0_19 = arith.constant 0 : index
      %c0_20 = arith.constant 0 : index
      %28 = vector.load %arg7[%c0_19, %c0_20] : memref<8x128xf32, #tpu.memory_space<vmem>>, vector<8x128xf32>
      tpu.vector_store %arg7[%c0_19, %c0_20], %27 {strides = array<i32>} : memref<8x128xf32, #tpu.memory_space<vmem>>, vector<8x128xf32>,
    } else {
    }
    %c0 = arith.constant 0 : index
    %c0_1 = arith.constant 0 : index
    %3 = vector.load %arg2[%c0, %c0_1] : memref<8x256xf32, #tpu.memory_space<vmem>>, vector<8x256xf32>
    %c0_2 = arith.constant 0 : index
    %c0_3 = arith.constant 0 : index
    %4 = vector.load %arg3[%c0_2, %c0_3] : memref<8x256xf32, #tpu.memory_space<vmem>>, vector<8x256xf32>
    %c0_4 = arith.constant 0 : index
    %c0_5 = arith.constant 0 : index
    %5 = vector.load %arg4[%c0_4, %c0_5] : memref<8x256xf32, #tpu.memory_space<vmem>>, vector<8x256xf32>
    %6 = arith.subf %3, %4 : vector<8x256xf32>
    %7 = arith.mulf %6, %5 : vector<8x256xf32>
    %c0_6 = arith.constant 0 : index
    %c0_7 = arith.constant 0 : index
    %8 = vector.load %arg6[%c0_6, %c0_7] : memref<8x128xf32, #tpu.memory_space<vmem>>, vector<8x128xf32>
    %c0_8 = arith.constant 0 : index
    %c0_9 = arith.constant 0 : index
    %9 = vector.load %arg7[%c0_8, %c0_9] : memref<8x128xf32, #tpu.memory_space<vmem>>, vector<8x128xf32>
    %10 = vector.extract_strided_slice %7 {offsets = [0, 0], sizes = [8, 128], strides = [1, 1]} : vector<8x256xf32> to vector<8x128xf32>
    %11 = arith.mulf %10, %10 : vector<8x128xf32>
    %12 = arith.addf %8, %11 : vector<8x128xf32>
    %13 = vector.extract_strided_slice %5 {offsets = [0, 0], sizes = [8, 128], strides = [1, 1]} : vector<8x256xf32> to vector<8x128xf32>
    %14 = arith.addf %9, %13 : vector<8x128xf32>
    %15 = vector.extract_strided_slice %7 {offsets = [0, 128], sizes = [8, 128], strides = [1, 1]} : vector<8x256xf32> to vector<8x128xf32>
    %16 = arith.mulf %15, %15 : vector<8x128xf32>
    %17 = arith.addf %12, %16 : vector<8x128xf32>
    %18 = vector.extract_strided_slice %5 {offsets = [0, 128], sizes = [8, 128], strides = [1, 1]} : vector<8x256xf32> to vector<8x128xf32>
    %19 = arith.addf %14, %18 : vector<8x128xf32>
    %c0_10 = arith.constant 0 : index
    %c0_11 = arith.constant 0 : index
    %20 = vector.load %arg6[%c0_10, %c0_11] : memref<8x128xf32, #tpu.memory_space<vmem>>, vector<8x128xf32>
    tpu.vector_store %arg6[%c0_10, %c0_11], %17 {strides = array<i32>} : memref<8x128xf32, #tpu.memory_space<vmem>>, vector<8x128xf32>,
    %c0_12 = arith.constant 0 : index
    %c0_13 = arith.constant 0 : index
    %21 = vector.load %arg7[%c0_12, %c0_13] : memref<8x128xf32, #tpu.memory_space<vmem>>, vector<8x128xf32>
    tpu.vector_store %arg7[%c0_12, %c0_13], %19 {strides = array<i32>} : memref<8x128xf32, #tpu.memory_space<vmem>>, vector<8x128xf32>,
    %c0_i32_14 = arith.constant 0 : i32
    %22 = arith.cmpi eq, %arg1, %c0_i32_14 : i32
    %23 = arith.extui %22 : i1 to i32
    %c0_i32_15 = arith.constant 0 : i32
    %24 = arith.cmpi ne, %23, %c0_i32_15 : i32
    scf.if %24 {
      %c0_16 = arith.constant 0 : index
      %c0_17 = arith.constant 0 : index
      %25 = vector.load %arg6[%c0_16, %c0_17] : memref<8x128xf32, #tpu.memory_space<vmem>>, vector<8x128xf32>
      %cst = arith.constant dense<0.000000e+00> : vector<8xf32>
      %26 = vector.multi_reduction <add>, %25, %cst [1] : vector<8x128xf32> to vector<8xf32>
      %27 = vector.shape_cast %26 : vector<8xf32> to vector<8x1xf32>
      %c0_18 = arith.constant 0 : index
      %c0_19 = arith.constant 0 : index
      %28 = vector.load %arg7[%c0_18, %c0_19] : memref<8x128xf32, #tpu.memory_space<vmem>>, vector<8x128xf32>
      %cst_20 = arith.constant dense<0.000000e+00> : vector<8xf32>
      %29 = vector.multi_reduction <add>, %28, %cst_20 [1] : vector<8x128xf32> to vector<8xf32>
      %30 = vector.shape_cast %29 : vector<8xf32> to vector<8x1xf32>
      %31 = arith.divf %27, %30 : vector<8x1xf32>
      %32 = math.sqrt %31 : vector<8x1xf32>
      %c0_21 = arith.constant 0 : index
      %c0_22 = arith.constant 0 : index
      %33 = vector.load %arg5[%c0_21, %c0_22] : memref<8x1xf32, #tpu.memory_space<vmem>>, vector<8x1xf32>
      tpu.vector_store %arg5[%c0_21, %c0_22], %32 {strides = array<i32>} : memref<8x1xf32, #tpu.memory_space<vmem>>, vector<8x1xf32>,
    } else {
    }
    return
  }
  func.func @transform_0(%arg0: i32, %arg1: i32) -> (i32, i32) {
    %c0_i32 = arith.constant 0 : i32
    return %arg0, %arg1 : i32, i32
  }
  func.func @transform_1(%arg0: i32, %arg1: i32) -> (i32, i32) {
    %c0_i32 = arith.constant 0 : i32
    return %arg0, %arg1 : i32, i32
  }
  func.func @transform_2(%arg0: i32, %arg1: i32) -> (i32, i32) {
    %c0_i32 = arith.constant 0 : i32
    return %arg0, %arg1 : i32, i32
  }
  func.func @transform_3(%arg0: i32, %arg1: i32) -> (i32, i32) {
    %c0_i32 = arith.constant 0 : i32
    %c0_i32_0 = arith.constant 0 : i32
    return %arg0, %c0_i32 : i32, i32
  }
}

</mosaic_0001>

<llo_original>
// kernel: tpu_custom_call.1
$region0: #{tpu_custom_call.1}
  #allocation0 [shape = 'u32[]', space=smem, size = 0x4, offset = 0x4, fixed_abs, tag = 'smem constant byte address 0x4 - core index']
  #allocation1 [shape = 'u32[144,128]{1,0:T(1,128)}', space=vmem, size = 0x12000, scoped, tag = 'internal scratch']
  #allocation2 [shape = 'f32[8,128]{1,0:T(8,128)}', space=vmem, size = 0x1000, scoped, tag = 'scratch operand']
  #allocation3 [shape = 'f32[8,128]{1,0:T(8,128)}', space=vmem, size = 0x1000, scoped, tag = 'scratch operand']
  %s0 = inlined_call_operand.hbm [shape: f32[8,256], index: 0, kind: input, shape index: {}]
  %s1 = inlined_call_operand.hbm [shape: f32[8,256], index: 1, kind: input, shape index: {}]
  %s2 = inlined_call_operand.hbm [shape: f32[8,256], index: 2, kind: input, shape index: {}]
  %s3 = inlined_call_operand.vmem [shape: f32[8,1], index: 3, kind: output, shape index: {}]
  %s4 = sld [smem:[#allocation0]]
  $region42: #{tpu_custom_call.1} parent=0
    _
  %s6 = ssub.s32 1, %s4
  %s7 = scalar_select 0, %s6, %s4
  $region1: #{tpu_custom_call.1} parent=0
    #allocation4 [shape = 'u8[8192]{0}', space=vmem, size = 0x2000, scoped, tag = 'input window, operand 0, single buffered']
    #allocation5 [shape = 's32[1]{0}', space=sflag, size = 0x4, scoped, tag = 'scoped memory for tpu_custom_call.1']
    #allocation6 [shape = 'u8[8192]{0}', space=vmem, size = 0x2000, scoped, tag = 'input window, operand 1, single buffered']
    #allocation7 [shape = 's32[1]{0}', space=sflag, size = 0x4, scoped, tag = 'scoped memory for tpu_custom_call.1']
    #allocation8 [shape = 'u8[8192]{0}', space=vmem, size = 0x2000, scoped, tag = 'input window, operand 2, single buffered']
    %8 = vsyncpa [#allocation5], 0
    %9 = vsyncpa [#allocation7], 0
    // Predicated region
    $region2: #{tpu_custom_call.1} parent=1 // pred_check
      _
    $region3: #{tpu_custom_call.1} parent=1 // pred_check_branch
      %11 = sbr.rel (0) target = $region5
    $region4: #{tpu_custom_call.1} parent=1 // pred_region
      %s13 = ssub.s32 256, 256
      %14 = vsyncadd [#allocation5], %s13
      %s16 = sshll.u32 [#allocation4], 4
      %s17 = int_to_ptr.vmem [resolvable:$true] %s16
      %19 = dma.hbm_to_vmem [thread:$0]  %s0, 256, %s17, [#allocation5]
    $region5: #{tpu_custom_call.1} parent=1 // pred_fallthru
      _
    // Predicated region
    $region6: #{tpu_custom_call.1} parent=1 // pred_check
      _
    $region7: #{tpu_custom_call.1} parent=1 // pred_check_branch
      %21 = sbr.rel (0) target = $region9
    $region8: #{tpu_custom_call.1} parent=1 // pred_region
      %s23 = ssub.s32 256, 256
      %24 = vsyncadd [#allocation7], %s23
      %s26 = sshll.u32 [#allocation6], 4
      %s27 = int_to_ptr.vmem [resolvable:$true] %s26
      %29 = dma.hbm_to_vmem [thread:$0]  %s1, 256, %s27, [#allocation7]
    $region9: #{tpu_custom_call.1} parent=1 // pred_fallthru
      _
    // Predicated region
    $region10: #{tpu_custom_call.1} parent=1 // pred_check
      _
    $region11: #{tpu_custom_call.1} parent=1 // pred_check_branch
      %31 = sbr.rel (0) target = $region13
    $region12: #{tpu_custom_call.1} parent=1 // pred_region
      %s33 = ssub.s32 256, 256
      %34 = vsyncadd [#allocation7], %s33
      %s36 = sshll.u32 [#allocation8], 4
      %s37 = int_to_ptr.vmem [resolvable:$true] %s36
      %39 = dma.hbm_to_vmem [thread:$0]  %s2, 256, %s37, [#allocation7]
    $region13: #{tpu_custom_call.1} parent=1 // pred_fallthru
      _
    // Predicated region
    $region14: #{tpu_custom_call.1} parent=1 // pred_check
      _
    $region15: #{tpu_custom_call.1} parent=1 // pred_check_branch
      %41 = sbr.rel (0) target = $region17
    $region16: #{tpu_custom_call.1} parent=1 // pred_region
      %42 = dma.done [#allocation5], 256
    $region17: #{tpu_custom_call.1} parent=1 // pred_fallthru
      _
    // Predicated region
    $region18: #{tpu_custom_call.1} parent=1 // pred_check
      _
    $region19: #{tpu_custom_call.1} parent=1 // pred_check_branch
      %44 = sbr.rel (0) target = $region21
    $region20: #{tpu_custom_call.1} parent=1 // pred_region
      %45 = dma.done [#allocation7], 256
    $region21: #{tpu_custom_call.1} parent=1 // pred_fallthru
      _
    // Predicated region
    $region22: #{tpu_custom_call.1} parent=1 // pred_check
      _
    $region23: #{tpu_custom_call.1} parent=1 // pred_check_branch
      %47 = sbr.rel (0) target = $region25
    $region24: #{tpu_custom_call.1} parent=1 // pred_region
      %48 = dma.done [#allocation7], 256
    $region25: #{tpu_custom_call.1} parent=1 // pred_fallthru
      _
    %p49 = scmp.eq.s32.totalorder 0, 0
    // Predicated region
    $region26: #{tpu_custom_call.1} parent=1 // pred_check
      %p50 = pneg %p49
    $region27: #{tpu_custom_call.1} parent=1 // pred_check_branch
      %52 = sbr.rel (%p50) target = $region29
    $region28: #{tpu_custom_call.1} parent=1 // pred_region
      %53 = vst [vmem:[#allocation2] sm:$0xff] 0.0
      %54 = vst [vmem:[#allocation3] sm:$0xff] 0.0
    $region29: #{tpu_custom_call.1} parent=1 // pred_fallthru
      _
    %v55 = vld [vmem:[#allocation4] sm:$0xff]
    %v56 = vld [vmem:[#allocation4 + $0x8] sm:$0xff]
    %v57 = vld [vmem:[#allocation6] sm:$0xff]
    %v58 = vld [vmem:[#allocation6 + $0x8] sm:$0xff]
    %v59 = vld [vmem:[#allocation8] sm:$0xff]
    %v60 = vld [vmem:[#allocation8 + $0x8] sm:$0xff]
    %v61 = vsub.f32 %v55, %v57
    %v62 = vsub.f32 %v56, %v58
    %v63 = vmul.f32 %v61, %v59
    %v64 = vmul.f32 %v62, %v60
    %v65 = vld [vmem:[#allocation2] sm:$0xff]
    %v66 = vld [vmem:[#allocation3] sm:$0xff]
    %v67 = vmul.f32 %v63, %v63
    %v68 = vadd.f32 %v65, %v67
    %v69 = vadd.f32 %v66, %v59
    %v70 = vmul.f32 %v64, %v64
    %v71 = vadd.f32 %v68, %v70
    %v72 = vadd.f32 %v69, %v60
    %73 = vst [vmem:[#allocation2] sm:$0xff] %v71
    %74 = vst [vmem:[#allocation3] sm:$0xff] %v72
    // Predicated region
    $region30: #{tpu_custom_call.1} parent=1 // pred_check
      %p75 = pneg %p49
    $region31: #{tpu_custom_call.1} parent=1 // pred_check_branch
      %77 = sbr.rel (%p75) target = $region33
    $region32: #{tpu_custom_call.1} parent=1 // pred_region
      %v78 = vld [vmem:[#allocation2] sm:$0xff]
      %79 = vadd.xlane.f32.xlu0 %v78
      %v80 = vpop.xlane.xlu0 %79
      %v81 = vld [vmem:[#allocation3] sm:$0xff]
      %82 = vadd.xlane.f32.xlu0 %v81
      %v83 = vpop.xlane.xlu0 %82
      %v84 = vrcp.pop %v83
      %v85 = vmul.f32 %v80, %v84
      %v86 = vrsqrt.pop %v85
      %v87 = vmul.f32 %v85, %v86
      %vm88 = vcmp.eq.f32.partialorder %v85, inf
      %v89 = vsel %vm88, %v85, %v87
      %vm90 = vcmp.eq.f32.partialorder %v85, 0.0
      %v91 = vand.u32 %v85, 2147483648
      %v92 = vsel %vm90, %v91, %v89
      %vm93 = vcmask 7168
      %94 = vst.msk [vmem:[%s3] sm:$0xff] %vm93, %v92
    $region33: #{tpu_custom_call.1} parent=1 // pred_fallthru
      _
    // Predicated region
    $region34: #{tpu_custom_call.1} parent=1 // pred_check
      _
    $region35: #{tpu_custom_call.1} parent=1 // pred_check_branch
      %96 = sbr.rel (0) target = $region37
    $region36: #{tpu_custom_call.1} parent=1 // pred_region
      _
    $region37: #{tpu_custom_call.1} parent=1 // pred_fallthru
      _
    // Predicated region
    $region38: #{tpu_custom_call.1} parent=1 // pred_check
      _
    $region39: #{tpu_custom_call.1} parent=1 // pred_check_branch
      %98 = sbr.rel (0) target = $region41
    $region40: #{tpu_custom_call.1} parent=1 // pred_region
      _
    $region41: #{tpu_custom_call.1} parent=1 // pred_fallthru
      _
    %99 = vsyncpa [#allocation5], 1
    %100 = vsyncpa [#allocation7], 1

</llo_original>
